<compile_context>
chip_gen: v7x
topology: tpu7x:2x2x1
jax: 0.10.0
libtpu: 0.0.40
codegen_flags: <defaults>
</compile_context>

<pallas_src>
import functools

import jax
import jax.numpy as jnp
from jax import lax
from jax.experimental import pallas as pl
from jax.experimental.pallas import tpu as pltpu

BN_EPS = 1e-4                      # matches eps=0.0001 in the PyTorch module
LANE = 128                         # TPU lane width: feature dims pad to this
SUBLANE_BF16 = 16                  # bf16 sublane pack: batch pads to this
VMEM_BUDGET_BYTES = 40 * 1024 * 1024   # conservative fit check (v7x: 64 MiB)
VMEM_LIMIT_BYTES = 48 * 1024 * 1024    # scoped VMEM limit requested from Mosaic


def _round_up(n, m):
    return ((n + m - 1) // m) * m


# --------------------------------------------------------------------------- #
# Fused kernel: Linear -> BN -> ReLU -> Linear -> BN -> ReLU -> Linear -> BN. #
# --------------------------------------------------------------------------- #
def _fused_mlp_kernel(x_ref, w1_ref, w2_ref, w3_ref,
                      gb1_ref, gb2_ref, gb3_ref, o_ref, *, b_real):
    b_pad = x_ref.shape[0]
    if b_real < b_pad:
        # Static row-validity mask: BN stats use only the real batch rows and
        # padded rows are forced back to exactly zero between layers.
        row_ids = lax.broadcasted_iota(jnp.int32, (b_pad, 1), 0)
        row_mask = (row_ids < b_real).astype(jnp.float32)
    else:
        row_mask = None
    inv_b = 1.0 / float(b_real)

    def layer(h_in_bf16, w_ref, gb_ref, apply_relu):
        # Padded batch rows of h_in are exactly zero -> their matmul rows are
        # zero -> they contribute nothing to the column sums below.
        h = jnp.dot(h_in_bf16, w_ref[...], preferred_element_type=jnp.float32)
        mean = jnp.sum(h, axis=0, keepdims=True) * inv_b
        centered = h - mean
        if row_mask is not None:
            centered = centered * row_mask           # zero out padded rows
        # Two-pass (centered) variance: no E[h^2]-E[h]^2 cancellation.
        var = jnp.sum(centered * centered, axis=0, keepdims=True) * inv_b
        inv_std = lax.rsqrt(var + BN_EPS)
        gamma = gb_ref[0:1, :]        # packed (2, n_pad): row 0 gamma, row 1 beta
        beta = gb_ref[1:2, :]
        out = centered * inv_std * gamma + beta
        if apply_relu:
            out = jnp.maximum(out, 0.0)
        if row_mask is not None:
            out = out * row_mask      # padded rows back to zero for next layer
        return out

    h1 = layer(x_ref[...], w1_ref, gb1_ref, True)
    h2 = layer(h1.astype(jnp.bfloat16), w2_ref, gb2_ref, True)
    h3 = layer(h2.astype(jnp.bfloat16), w3_ref, gb3_ref, False)
    o_ref[...] = h3.astype(o_ref.dtype)


# --------------------------------------------------------------------------- #
# One-time parameter preparation (padding / bf16 cast / gamma-beta packing).  #
# --------------------------------------------------------------------------- #
def prepare_params(params):
    """Pad + cast weights to lane-dense bf16 and pack gamma/beta, once."""
    w1, w2, w3, g1, b1, g2, b2, g3, b3 = params
    in_features = w1.shape[0]
    h1_units = w1.shape[1]
    h2_units = w2.shape[1]
    out_features = w3.shape[1]

    f_pad = _round_up(in_features, LANE)
    h1_pad = _round_up(h1_units, LANE)
    h2_pad = _round_up(h2_units, LANE)
    o_pad = _round_up(out_features, LANE)

    def pad_w(w, kp, np_):
        k, n = w.shape
        wp = jnp.zeros((kp, np_), jnp.float32).at[:k, :n].set(w)
        return wp.astype(jnp.bfloat16)

    def pack_gb(g, b, np_):
        n = g.shape[0]
        gb = jnp.zeros((2, np_), jnp.float32)
        gb = gb.at[0, :n].set(jnp.reshape(g, (-1,)))
        gb = gb.at[1, :n].set(jnp.reshape(b, (-1,)))
        return gb

    prepared = {
        "w1": pad_w(w1, f_pad, h1_pad),
        "w2": pad_w(w2, h1_pad, h2_pad),
        "w3": pad_w(w3, h2_pad, o_pad),
        "gb1": pack_gb(g1, b1, h1_pad),
        "gb2": pack_gb(g2, b2, h2_pad),
        "gb3": pack_gb(g3, b3, o_pad),
    }
    dims = (in_features, out_features, f_pad, h1_pad, h2_pad, o_pad)
    return prepared, dims


def _vmem_bytes_estimate(b_pad, f_pad, h1_pad, h2_pad, o_pad):
    bf16_ops = 2 * (b_pad * f_pad + f_pad * h1_pad
                    + h1_pad * h2_pad + h2_pad * o_pad)
    gb = 4 * 2 * (h1_pad + h2_pad + o_pad)
    out = 4 * b_pad * o_pad
    # f32 temporaries (h, centered, normalized out) for the widest layer,
    # with generous x4 headroom.
    tmp = 4 * 4 * b_pad * max(h1_pad, h2_pad, o_pad)
    # x2 on operands/output: buffering headroom even for the single-step grid.
    return 2 * (bf16_ops + gb + out) + tmp


# --------------------------------------------------------------------------- #
# Full forward.                                                               #
# --------------------------------------------------------------------------- #
def mlp_cl_forward(x, prepared, *, dims):
    """x: any shape whose trailing dims flatten to in_features (x.view(-1, F))."""
    in_features, out_features, f_pad, h1_pad, h2_pad, o_pad = dims

    x2d = x.reshape(-1, in_features).astype(jnp.float32)
    B = x2d.shape[0]
    b_pad = _round_up(B, SUBLANE_BF16)

    est = _vmem_bytes_estimate(b_pad, f_pad, h1_pad, h2_pad, o_pad)
    if est > VMEM_BUDGET_BYTES:
        # TODO(synk): batch-tiled two-pass BN fallback for very large batches.
        raise NotImplementedError(
            f"fused MLP VMEM estimate {est} B exceeds budget {VMEM_BUDGET_BYTES} B")

    # Lane/sublane-dense, zero-padded bf16 input slab.
    x_p = jnp.zeros((b_pad, f_pad), jnp.float32).at[:B, :in_features].set(x2d)
    x_p = x_p.astype(jnp.bfloat16)

    kernel = functools.partial(_fused_mlp_kernel, b_real=B)

    flops = 2 * b_pad * (f_pad * h1_pad + h1_pad * h2_pad + h2_pad * o_pad)
    bytes_accessed = (
        x_p.size * 2
        + (prepared["w1"].size + prepared["w2"].size + prepared["w3"].size) * 2
        + (prepared["gb1"].size + prepared["gb2"].size + prepared["gb3"].size) * 4
        + b_pad * o_pad * 4)

    out = pl.pallas_call(
        kernel,
        out_shape=jax.ShapeDtypeStruct((b_pad, o_pad), jnp.float32),
        grid=(1,),
        in_specs=[
            pl.BlockSpec((b_pad, f_pad), lambda i: (0, 0)),     # x (full batch)
            pl.BlockSpec((f_pad, h1_pad), lambda i: (0, 0)),    # W1
            pl.BlockSpec((h1_pad, h2_pad), lambda i: (0, 0)),   # W2
            pl.BlockSpec((h2_pad, o_pad), lambda i: (0, 0)),    # W3
            pl.BlockSpec((2, h1_pad), lambda i: (0, 0)),        # gamma/beta 1
            pl.BlockSpec((2, h2_pad), lambda i: (0, 0)),        # gamma/beta 2
            pl.BlockSpec((2, o_pad), lambda i: (0, 0)),         # gamma/beta 3
        ],
        out_specs=pl.BlockSpec((b_pad, o_pad), lambda i: (0, 0)),
        compiler_params=pltpu.CompilerParams(
            dimension_semantics=("arbitrary",),
            vmem_limit_bytes=VMEM_LIMIT_BYTES,
        ),
        cost_estimate=pl.CostEstimate(
            flops=flops,
            transcendentals=h1_pad + h2_pad + o_pad,   # rsqrt per feature
            bytes_accessed=bytes_accessed,
        ),
    )(x_p, prepared["w1"], prepared["w2"], prepared["w3"],
      prepared["gb1"], prepared["gb2"], prepared["gb3"])

    return out[:B, :out_features]


# --------------------------------------------------------------------------- #
# Params + pure-JAX reference (PyTorch training-mode semantics).              #
# --------------------------------------------------------------------------- #
def init_params(key, in_features, out_features, num_units):
    """Linear weights ~ U(-1/sqrt(fan_in), +), stored (in, out); BN gamma=1, beta=0."""
    k1, k2, k3 = jax.random.split(key, 3)

    def lin(k, fan_in, fan_out):
        bound = 1.0 / jnp.sqrt(jnp.float32(fan_in))
        return jax.random.uniform(k, (fan_in, fan_out), jnp.float32, -bound, bound)

    w1 = lin(k1, in_features, num_units)
    w2 = lin(k2, num_units, num_units)
    w3 = lin(k3, num_units, out_features)

    g1 = jnp.ones((num_units,), jnp.float32)
    b1 = jnp.zeros((num_units,), jnp.float32)
    g2 = jnp.ones((num_units,), jnp.float32)
    b2 = jnp.zeros((num_units,), jnp.float32)
    g3 = jnp.ones((out_features,), jnp.float32)
    b3 = jnp.zeros((out_features,), jnp.float32)
    return (w1, w2, w3, g1, b1, g2, b2, g3, b3)


def reference_forward(x, params):
    """Plain-JAX f32 reference mirroring the PyTorch forward (training-mode BN)."""
    w1, w2, w3, g1, b1, g2, b2, g3, b3 = params
    h = x.reshape(-1, w1.shape[0]).astype(jnp.float32)

    def bn(h, g, b):
        m = h.mean(axis=0, keepdims=True)
        v = ((h - m) ** 2).mean(axis=0, keepdims=True)
        return (h - m) / jnp.sqrt(v + BN_EPS) * g + b

    h = jax.nn.relu(bn(h @ w1, g1, b1))
    h = jax.nn.relu(bn(h @ w2, g2, b2))
    return bn(h @ w3, g3, b3)


if __name__ == "__main__":
    in_features = 32
    num_units = 32
    out_features = 16
    batch = 8

    key = jax.random.PRNGKey(0)
    kx, kp = jax.random.split(key)

    # Input shaped like an "image" batch; forward flattens to (-1, in_features).
    x = jax.random.normal(kx, (batch, 1, 4, 8), jnp.float32)  # 1*4*8 == in_features
    params = init_params(kp, in_features, out_features, num_units)

    prepared, dims = prepare_params(params)          # one-time pad/cast/pack
    fwd = jax.jit(functools.partial(mlp_cl_forward, dims=dims))
    out = jax.block_until_ready(fwd(x, prepared))

    ref = reference_forward(x, params)
    assert out.shape == (batch, out_features), out.shape
    max_err = float(jnp.max(jnp.abs(out - ref)))
    # Tolerance accounts for bf16 matmul inputs / bf16 inter-layer activations
    # (f32 accumulation + f32 BN math).
    assert max_err < 5e-2, f"mismatch vs reference: max abs err {max_err}"

    print("KERNEL_OK")
</pallas_src>

<mosaic_0001>
module attributes {stable_mosaic.version = 11 : i64} {
  func.func @_fused_mlp_kernel(%arg0: i32, %arg1: memref<16x128xbf16, #tpu.memory_space<vmem>>, %arg2: memref<128x128xbf16, #tpu.memory_space<vmem>>, %arg3: memref<128x128xbf16, #tpu.memory_space<vmem>>, %arg4: memref<128x128xbf16, #tpu.memory_space<vmem>>, %arg5: memref<2x128xf32, #tpu.memory_space<vmem>>, %arg6: memref<2x128xf32, #tpu.memory_space<vmem>>, %arg7: memref<2x128xf32, #tpu.memory_space<vmem>>, %arg8: memref<16x128xf32, #tpu.memory_space<vmem>>) attributes {dimension_semantics = [#tpu.dimension_semantics<arbitrary>], iteration_bounds = array<i64: 1>, scalar_prefetch = 0 : i64, scratch_operands = 0 : i64, tpu.core_type = #tpu.core_type<tc>, window_params = [{pipeline_mode = #tpu.pipeline_mode<synchronous>, transform_indices = @transform_0, window_bounds = array<i64: 16, 128>}, {pipeline_mode = #tpu.pipeline_mode<synchronous>, transform_indices = @transform_1, window_bounds = array<i64: 128, 128>}, {pipeline_mode = #tpu.pipeline_mode<synchronous>, transform_indices = @transform_2, window_bounds = array<i64: 128, 128>}, {pipeline_mode = #tpu.pipeline_mode<synchronous>, transform_indices = @transform_3, window_bounds = array<i64: 128, 128>}, {pipeline_mode = #tpu.pipeline_mode<synchronous>, transform_indices = @transform_4, window_bounds = array<i64: 2, 128>}, {pipeline_mode = #tpu.pipeline_mode<synchronous>, transform_indices = @transform_5, window_bounds = array<i64: 2, 128>}, {pipeline_mode = #tpu.pipeline_mode<synchronous>, transform_indices = @transform_6, window_bounds = array<i64: 2, 128>}, {pipeline_mode = #tpu.pipeline_mode<synchronous>, transform_indices = @transform_7, window_bounds = array<i64: 16, 128>}]} {
    %0 = tpu.iota {dimensions = array<i32: 0>} : vector<16x1xi32>
    %c8_i32 = arith.constant 8 : i32
    %1 = vector.broadcast %c8_i32 : i32 to vector<16x1xi32>
    %2 = arith.cmpi slt, %0, %1 : vector<16x1xi32>
    %3 = arith.extui %2 : vector<16x1xi1> to vector<16x1xi32>
    %4 = arith.sitofp %3 : vector<16x1xi32> to vector<16x1xf32>
    %c0 = arith.constant 0 : index
    %c0_0 = arith.constant 0 : index
    %5 = vector.load %arg1[%c0, %c0_0] : memref<16x128xbf16, #tpu.memory_space<vmem>>, vector<16x128xbf16>
    %c0_1 = arith.constant 0 : index
    %c0_2 = arith.constant 0 : index
    %6 = vector.load %arg2[%c0_1, %c0_2] : memref<128x128xbf16, #tpu.memory_space<vmem>>, vector<128x128xbf16>
    %cst = arith.constant dense<0.000000e+00> : vector<16x128xf32>
    %7 = tpu.matmul %5, %6, %cst {dimension_numbers = #tpu.dot_dimension_numbers<[1], [0], [0], [1], [0, 0, 1, 1], [], []>} : vector<16x128xbf16>, vector<128x128xbf16>, vector<16x128xf32> -> vector<16x128xf32>
    %cst_3 = arith.constant dense<0.000000e+00> : vector<128xf32>
    %8 = vector.multi_reduction <add>, %7, %cst_3 [0] : vector<16x128xf32> to vector<128xf32>
    %9 = vector.shape_cast %8 : vector<128xf32> to vector<1x128xf32>
    %cst_4 = arith.constant 1.250000e-01 : f32
    %10 = vector.broadcast %cst_4 : f32 to vector<1x128xf32>
    %11 = arith.mulf %9, %10 : vector<1x128xf32>
    %12 = vector.broadcast %11 : vector<1x128xf32> to vector<16x128xf32>
    %13 = arith.subf %7, %12 : vector<16x128xf32>
    %14 = vector.broadcast %4 : vector<16x1xf32> to vector<16x128xf32>
    %15 = arith.mulf %13, %14 : vector<16x128xf32>
    %16 = arith.mulf %15, %15 : vector<16x128xf32>
    %cst_5 = arith.constant dense<0.000000e+00> : vector<128xf32>
    %17 = vector.multi_reduction <add>, %16, %cst_5 [0] : vector<16x128xf32> to vector<128xf32>
    %18 = vector.shape_cast %17 : vector<128xf32> to vector<1x128xf32>
    %cst_6 = arith.constant 1.250000e-01 : f32
    %19 = vector.broadcast %cst_6 : f32 to vector<1x128xf32>
    %20 = arith.mulf %18, %19 : vector<1x128xf32>
    %cst_7 = arith.constant 9.99999974E-5 : f32
    %21 = vector.broadcast %cst_7 : f32 to vector<1x128xf32>
    %22 = arith.addf %20, %21 : vector<1x128xf32>
    %23 = math.rsqrt %22 : vector<1x128xf32>
    %c0_8 = arith.constant 0 : index
    %c0_9 = arith.constant 0 : index
    %24 = vector.load %arg5[%c0_8, %c0_9] : memref<2x128xf32, #tpu.memory_space<vmem>>, vector<1x128xf32>
    %c1 = arith.constant 1 : index
    %c0_10 = arith.constant 0 : index
    %25 = vector.load %arg5[%c1, %c0_10] : memref<2x128xf32, #tpu.memory_space<vmem>>, vector<1x128xf32>
    %26 = vector.broadcast %23 : vector<1x128xf32> to vector<16x128xf32>
    %27 = arith.mulf %15, %26 : vector<16x128xf32>
    %28 = vector.broadcast %24 : vector<1x128xf32> to vector<16x128xf32>
    %29 = arith.mulf %27, %28 : vector<16x128xf32>
    %30 = vector.broadcast %25 : vector<1x128xf32> to vector<16x128xf32>
    %31 = arith.addf %29, %30 : vector<16x128xf32>
    %cst_11 = arith.constant 0.000000e+00 : f32
    %32 = vector.broadcast %cst_11 : f32 to vector<16x128xf32>
    %33 = arith.maximumf %31, %32 : vector<16x128xf32>
    %34 = vector.broadcast %4 : vector<16x1xf32> to vector<16x128xf32>
    %35 = arith.mulf %33, %34 : vector<16x128xf32>
    %36 = arith.truncf %35 : vector<16x128xf32> to vector<16x128xbf16>
    %c0_12 = arith.constant 0 : index
    %c0_13 = arith.constant 0 : index
    %37 = vector.load %arg3[%c0_12, %c0_13] : memref<128x128xbf16, #tpu.memory_space<vmem>>, vector<128x128xbf16>
    %cst_14 = arith.constant dense<0.000000e+00> : vector<16x128xf32>
    %38 = tpu.matmul %36, %37, %cst_14 {dimension_numbers = #tpu.dot_dimension_numbers<[1], [0], [0], [1], [0, 0, 1, 1], [], []>} : vector<16x128xbf16>, vector<128x128xbf16>, vector<16x128xf32> -> vector<16x128xf32>
    %cst_15 = arith.constant dense<0.000000e+00> : vector<128xf32>
    %39 = vector.multi_reduction <add>, %38, %cst_15 [0] : vector<16x128xf32> to vector<128xf32>
    %40 = vector.shape_cast %39 : vector<128xf32> to vector<1x128xf32>
    %cst_16 = arith.constant 1.250000e-01 : f32
    %41 = vector.broadcast %cst_16 : f32 to vector<1x128xf32>
    %42 = arith.mulf %40, %41 : vector<1x128xf32>
    %43 = vector.broadcast %42 : vector<1x128xf32> to vector<16x128xf32>
    %44 = arith.subf %38, %43 : vector<16x128xf32>
    %45 = vector.broadcast %4 : vector<16x1xf32> to vector<16x128xf32>
    %46 = arith.mulf %44, %45 : vector<16x128xf32>
    %47 = arith.mulf %46, %46 : vector<16x128xf32>
    %cst_17 = arith.constant dense<0.000000e+00> : vector<128xf32>
    %48 = vector.multi_reduction <add>, %47, %cst_17 [0] : vector<16x128xf32> to vector<128xf32>
    %49 = vector.shape_cast %48 : vector<128xf32> to vector<1x128xf32>
    %cst_18 = arith.constant 1.250000e-01 : f32
    %50 = vector.broadcast %cst_18 : f32 to vector<1x128xf32>
    %51 = arith.mulf %49, %50 : vector<1x128xf32>
    %cst_19 = arith.constant 9.99999974E-5 : f32
    %52 = vector.broadcast %cst_19 : f32 to vector<1x128xf32>
    %53 = arith.addf %51, %52 : vector<1x128xf32>
    %54 = math.rsqrt %53 : vector<1x128xf32>
    %c0_20 = arith.constant 0 : index
    %c0_21 = arith.constant 0 : index
    %55 = vector.load %arg6[%c0_20, %c0_21] : memref<2x128xf32, #tpu.memory_space<vmem>>, vector<1x128xf32>
    %c1_22 = arith.constant 1 : index
    %c0_23 = arith.constant 0 : index
    %56 = vector.load %arg6[%c1_22, %c0_23] : memref<2x128xf32, #tpu.memory_space<vmem>>, vector<1x128xf32>
    %57 = vector.broadcast %54 : vector<1x128xf32> to vector<16x128xf32>
    %58 = arith.mulf %46, %57 : vector<16x128xf32>
    %59 = vector.broadcast %55 : vector<1x128xf32> to vector<16x128xf32>
    %60 = arith.mulf %58, %59 : vector<16x128xf32>
    %61 = vector.broadcast %56 : vector<1x128xf32> to vector<16x128xf32>
    %62 = arith.addf %60, %61 : vector<16x128xf32>
    %cst_24 = arith.constant 0.000000e+00 : f32
    %63 = vector.broadcast %cst_24 : f32 to vector<16x128xf32>
    %64 = arith.maximumf %62, %63 : vector<16x128xf32>
    %65 = vector.broadcast %4 : vector<16x1xf32> to vector<16x128xf32>
    %66 = arith.mulf %64, %65 : vector<16x128xf32>
    %67 = arith.truncf %66 : vector<16x128xf32> to vector<16x128xbf16>
    %c0_25 = arith.constant 0 : index
    %c0_26 = arith.constant 0 : index
    %68 = vector.load %arg4[%c0_25, %c0_26] : memref<128x128xbf16, #tpu.memory_space<vmem>>, vector<128x128xbf16>
    %cst_27 = arith.constant dense<0.000000e+00> : vector<16x128xf32>
    %69 = tpu.matmul %67, %68, %cst_27 {dimension_numbers = #tpu.dot_dimension_numbers<[1], [0], [0], [1], [0, 0, 1, 1], [], []>} : vector<16x128xbf16>, vector<128x128xbf16>, vector<16x128xf32> -> vector<16x128xf32>
    %cst_28 = arith.constant dense<0.000000e+00> : vector<128xf32>
    %70 = vector.multi_reduction <add>, %69, %cst_28 [0] : vector<16x128xf32> to vector<128xf32>
    %71 = vector.shape_cast %70 : vector<128xf32> to vector<1x128xf32>
    %cst_29 = arith.constant 1.250000e-01 : f32
    %72 = vector.broadcast %cst_29 : f32 to vector<1x128xf32>
    %73 = arith.mulf %71, %72 : vector<1x128xf32>
    %74 = vector.broadcast %73 : vector<1x128xf32> to vector<16x128xf32>
    %75 = arith.subf %69, %74 : vector<16x128xf32>
    %76 = vector.broadcast %4 : vector<16x1xf32> to vector<16x128xf32>
    %77 = arith.mulf %75, %76 : vector<16x128xf32>
    %78 = arith.mulf %77, %77 : vector<16x128xf32>
    %cst_30 = arith.constant dense<0.000000e+00> : vector<128xf32>
    %79 = vector.multi_reduction <add>, %78, %cst_30 [0] : vector<16x128xf32> to vector<128xf32>
    %80 = vector.shape_cast %79 : vector<128xf32> to vector<1x128xf32>
    %cst_31 = arith.constant 1.250000e-01 : f32
    %81 = vector.broadcast %cst_31 : f32 to vector<1x128xf32>
    %82 = arith.mulf %80, %81 : vector<1x128xf32>
    %cst_32 = arith.constant 9.99999974E-5 : f32
    %83 = vector.broadcast %cst_32 : f32 to vector<1x128xf32>
    %84 = arith.addf %82, %83 : vector<1x128xf32>
    %85 = math.rsqrt %84 : vector<1x128xf32>
    %c0_33 = arith.constant 0 : index
    %c0_34 = arith.constant 0 : index
    %86 = vector.load %arg7[%c0_33, %c0_34] : memref<2x128xf32, #tpu.memory_space<vmem>>, vector<1x128xf32>
    %c1_35 = arith.constant 1 : index
    %c0_36 = arith.constant 0 : index
    %87 = vector.load %arg7[%c1_35, %c0_36] : memref<2x128xf32, #tpu.memory_space<vmem>>, vector<1x128xf32>
    %88 = vector.broadcast %85 : vector<1x128xf32> to vector<16x128xf32>
    %89 = arith.mulf %77, %88 : vector<16x128xf32>
    %90 = vector.broadcast %86 : vector<1x128xf32> to vector<16x128xf32>
    %91 = arith.mulf %89, %90 : vector<16x128xf32>
    %92 = vector.broadcast %87 : vector<1x128xf32> to vector<16x128xf32>
    %93 = arith.addf %91, %92 : vector<16x128xf32>
    %94 = vector.broadcast %4 : vector<16x1xf32> to vector<16x128xf32>
    %95 = arith.mulf %93, %94 : vector<16x128xf32>
    %c0_37 = arith.constant 0 : index
    %c0_38 = arith.constant 0 : index
    %96 = vector.load %arg8[%c0_37, %c0_38] : memref<16x128xf32, #tpu.memory_space<vmem>>, vector<16x128xf32>
    tpu.vector_store %arg8[%c0_37, %c0_38], %95 {strides = array<i32>} : memref<16x128xf32, #tpu.memory_space<vmem>>, vector<16x128xf32>,
    return
  }
  func.func @transform_0(%arg0: i32) -> (i32, i32) {
    %c0_i32 = arith.constant 0 : i32
    %c0_i32_0 = arith.constant 0 : i32
    %c0_i32_1 = arith.constant 0 : i32
    return %c0_i32, %c0_i32_0 : i32, i32
  }
  func.func @transform_1(%arg0: i32) -> (i32, i32) {
    %c0_i32 = arith.constant 0 : i32
    %c0_i32_0 = arith.constant 0 : i32
    %c0_i32_1 = arith.constant 0 : i32
    return %c0_i32, %c0_i32_0 : i32, i32
  }
  func.func @transform_2(%arg0: i32) -> (i32, i32) {
    %c0_i32 = arith.constant 0 : i32
    %c0_i32_0 = arith.constant 0 : i32
    %c0_i32_1 = arith.constant 0 : i32
    return %c0_i32, %c0_i32_0 : i32, i32
  }
  func.func @transform_3(%arg0: i32) -> (i32, i32) {
    %c0_i32 = arith.constant 0 : i32
    %c0_i32_0 = arith.constant 0 : i32
    %c0_i32_1 = arith.constant 0 : i32
    return %c0_i32, %c0_i32_0 : i32, i32
  }
  func.func @transform_4(%arg0: i32) -> (i32, i32) {
    %c0_i32 = arith.constant 0 : i32
    %c0_i32_0 = arith.constant 0 : i32
    %c0_i32_1 = arith.constant 0 : i32
    return %c0_i32, %c0_i32_0 : i32, i32
  }
  func.func @transform_5(%arg0: i32) -> (i32, i32) {
    %c0_i32 = arith.constant 0 : i32
    %c0_i32_0 = arith.constant 0 : i32
    %c0_i32_1 = arith.constant 0 : i32
    return %c0_i32, %c0_i32_0 : i32, i32
  }
  func.func @transform_6(%arg0: i32) -> (i32, i32) {
    %c0_i32 = arith.constant 0 : i32
    %c0_i32_0 = arith.constant 0 : i32
    %c0_i32_1 = arith.constant 0 : i32
    return %c0_i32, %c0_i32_0 : i32, i32
  }
  func.func @transform_7(%arg0: i32) -> (i32, i32) {
    %c0_i32 = arith.constant 0 : i32
    %c0_i32_0 = arith.constant 0 : i32
    %c0_i32_1 = arith.constant 0 : i32
    return %c0_i32, %c0_i32_0 : i32, i32
  }
}

</mosaic_0001>

<llo_original>
// kernel: mlp_cl_forward.1
$region0: #{mlp_cl_forward.1}
  #allocation0 [shape = 'u32[]', space=smem, size = 0x4, offset = 0x4, fixed_abs, tag = 'smem constant byte address 0x4 - core index']
  #allocation1 [shape = 'u32[144,128]{1,0:T(1,128)}', space=vmem, size = 0x12000, scoped, tag = 'internal scratch']
  %s0 = inlined_call_operand.vmem [shape: bf16[16,128], index: 0, kind: input, shape index: {}]
  %s1 = inlined_call_operand.vmem [shape: bf16[128,128], index: 1, kind: input, shape index: {}]
  %s2 = inlined_call_operand.hbm [shape: bf16[128,128], index: 2, kind: input, shape index: {}]
  %s3 = inlined_call_operand.hbm [shape: bf16[128,128], index: 3, kind: input, shape index: {}]
  %s4 = inlined_call_operand.vmem [shape: f32[2,128], index: 4, kind: input, shape index: {}]
  %s5 = inlined_call_operand.vmem [shape: f32[2,128], index: 5, kind: input, shape index: {}]
  %s6 = inlined_call_operand.vmem [shape: f32[2,128], index: 6, kind: input, shape index: {}]
  %s7 = inlined_call_operand.vmem [shape: f32[16,128], index: 7, kind: output, shape index: {}]
  %s8 = sld [smem:[#allocation0]]
  $region46: #{mlp_cl_forward.1} parent=0
    _
  %s10 = ssub.s32 1, %s8
  %s11 = scalar_select 0, %s10, %s8
  $region1: #{mlp_cl_forward.1} parent=0
    #allocation2 [shape = 'u8[32768]{0}', space=vmem, size = 0x8000, scoped, tag = 'input window, operand 2, single buffered']
    #allocation3 [shape = 's32[1]{0}', space=sflag, size = 0x4, scoped, tag = 'scoped memory for mlp_cl_forward.1']
    #allocation4 [shape = 'u8[32768]{0}', space=vmem, size = 0x8000, scoped, tag = 'input window, operand 3, single buffered']
    #allocation5 [shape = 's32[1]{0}', space=sflag, size = 0x4, scoped, tag = 'scoped memory for mlp_cl_forward.1']
    %12 = vsyncpa [#allocation3], 0
    %13 = vsyncpa [#allocation5], 0
    // Predicated region
    $region2: #{mlp_cl_forward.1} parent=1 // pred_check
      _
    $region3: #{mlp_cl_forward.1} parent=1 // pred_check_branch
      %15 = sbr.rel (0) target = $region5
    $region4: #{mlp_cl_forward.1} parent=1 // pred_region
      _
    $region5: #{mlp_cl_forward.1} parent=1 // pred_fallthru
      _
    // Predicated region
    $region6: #{mlp_cl_forward.1} parent=1 // pred_check
      _
    $region7: #{mlp_cl_forward.1} parent=1 // pred_check_branch
      %17 = sbr.rel (0) target = $region9
    $region8: #{mlp_cl_forward.1} parent=1 // pred_region
      _
    $region9: #{mlp_cl_forward.1} parent=1 // pred_fallthru
      _
    // Predicated region
    $region10: #{mlp_cl_forward.1} parent=1 // pred_check
      _
    $region11: #{mlp_cl_forward.1} parent=1 // pred_check_branch
      %19 = sbr.rel (0) target = $region13
    $region12: #{mlp_cl_forward.1} parent=1 // pred_region
      %s21 = ssub.s32 1024, 1024
      %22 = vsyncadd [#allocation3], %s21
      %s23 = sshll.u32 [#allocation2], 4
      %s24 = int_to_ptr.vmem [resolvable:$true] %s23
      %29 = dma.hbm_to_vmem [thread:$0]  %s2, 1024, %s24, [#allocation3], 64, 64, 4
    $region13: #{mlp_cl_forward.1} parent=1 // pred_fallthru
      _
    // Predicated region
    $region14: #{mlp_cl_forward.1} parent=1 // pred_check
      _
    $region15: #{mlp_cl_forward.1} parent=1 // pred_check_branch
      %31 = sbr.rel (0) target = $region17
    $region16: #{mlp_cl_forward.1} parent=1 // pred_region
      %s33 = ssub.s32 1024, 1024
      %34 = vsyncadd [#allocation5], %s33
      %s35 = sshll.u32 [#allocation4], 4
      %s36 = int_to_ptr.vmem [resolvable:$true] %s35
      %41 = dma.hbm_to_vmem [thread:$0]  %s3, 1024, %s36, [#allocation5], 64, 64, 4
    $region17: #{mlp_cl_forward.1} parent=1 // pred_fallthru
      _
    // Predicated region
    $region18: #{mlp_cl_forward.1} parent=1 // pred_check
      _
    $region19: #{mlp_cl_forward.1} parent=1 // pred_check_branch
      %43 = sbr.rel (0) target = $region21
    $region20: #{mlp_cl_forward.1} parent=1 // pred_region
      _
    $region21: #{mlp_cl_forward.1} parent=1 // pred_fallthru
      _
    // Predicated region
    $region22: #{mlp_cl_forward.1} parent=1 // pred_check
      _
    $region23: #{mlp_cl_forward.1} parent=1 // pred_check_branch
      %45 = sbr.rel (0) target = $region25
    $region24: #{mlp_cl_forward.1} parent=1 // pred_region
      _
    $region25: #{mlp_cl_forward.1} parent=1 // pred_fallthru
      _
    // Predicated region
    $region26: #{mlp_cl_forward.1} parent=1 // pred_check
      _
    $region27: #{mlp_cl_forward.1} parent=1 // pred_check_branch
      %47 = sbr.rel (0) target = $region29
    $region28: #{mlp_cl_forward.1} parent=1 // pred_region
      _
    $region29: #{mlp_cl_forward.1} parent=1 // pred_fallthru
      _
    // Predicated region
    $region30: #{mlp_cl_forward.1} parent=1 // pred_check
      _
    $region31: #{mlp_cl_forward.1} parent=1 // pred_check_branch
      %49 = sbr.rel (0) target = $region33
    $region32: #{mlp_cl_forward.1} parent=1 // pred_region
      %50 = dma.done [#allocation3], 1024
    $region33: #{mlp_cl_forward.1} parent=1 // pred_fallthru
      _
    // Predicated region
    $region34: #{mlp_cl_forward.1} parent=1 // pred_check
      _
    $region35: #{mlp_cl_forward.1} parent=1 // pred_check_branch
      %52 = sbr.rel (0) target = $region37
    $region36: #{mlp_cl_forward.1} parent=1 // pred_region
      %53 = dma.done [#allocation5], 1024
    $region37: #{mlp_cl_forward.1} parent=1 // pred_fallthru
      _
    %v55 = vlaneseq
    %v56 = vshrl.u32 %v55, 7
    %v57 = vadd.s32 %v56, 8
    %vm58 = vcmp.lt.s32.totalorder %v56, 8
    %vm59 = vcmp.lt.s32.totalorder %v57, 8
    %v60 = vsel %vm58, 1, 0
    %v61 = vsel %vm59, 1, 0
    %v62 = vcvt.s32.f32 %v60
    %v63 = vcvt.s32.f32 %v61
    %v64 = vld [vmem:[%s0] sm:$0xf]
    %v65 = vld [vmem:[%s0 + $0x4] sm:$0xf]
    %v66 = vld [vmem:[%s1] sm:$0xf]
    %v67 = vld [vmem:[%s1 + $0x4] sm:$0xf]
    %v68 = vld [vmem:[%s1 + $0x8] sm:$0xf]
    %v69 = vld [vmem:[%s1 + $0xc] sm:$0xf]
    %v70 = vld [vmem:[%s1 + $0x10] sm:$0xf]
    %v71 = vld [vmem:[%s1 + $0x14] sm:$0xf]
    %v72 = vld [vmem:[%s1 + $0x18] sm:$0xf]
    %v73 = vld [vmem:[%s1 + $0x1c] sm:$0xf]
    %v74 = vld [vmem:[%s1 + $0x20] sm:$0xf]
    %v75 = vld [vmem:[%s1 + $0x24] sm:$0xf]
    %v76 = vld [vmem:[%s1 + $0x28] sm:$0xf]
    %v77 = vld [vmem:[%s1 + $0x2c] sm:$0xf]
    %v78 = vld [vmem:[%s1 + $0x30] sm:$0xf]
    %v79 = vld [vmem:[%s1 + $0x34] sm:$0xf]
    %v80 = vld [vmem:[%s1 + $0x38] sm:$0xf]
    %v81 = vld [vmem:[%s1 + $0x3c] sm:$0xf]
    %v84 = vunpack.c.l.b16 %v64
    %v85 = vunpack.c.l.b16 %v65
    %v86 = vpack.c.b16 %v85, %v84
    %v104 = vunpack.c.l.b16 %v66
    %v105 = vunpack.c.l.b16 %v67
    %v106 = vunpack.c.l.b16 %v68
    %v107 = vunpack.c.l.b16 %v69
    %v108 = vunpack.c.l.b16 %v70
    %v109 = vunpack.c.l.b16 %v71
    %v110 = vunpack.c.l.b16 %v72
    %v111 = vunpack.c.l.b16 %v73
    %v112 = vunpack.c.l.b16 %v74
    %v113 = vunpack.c.l.b16 %v75
    %v114 = vunpack.c.l.b16 %v76
    %v115 = vunpack.c.l.b16 %v77
    %v116 = vunpack.c.l.b16 %v78
    %v117 = vunpack.c.l.b16 %v79
    %v118 = vunpack.c.l.b16 %v80
    %v119 = vunpack.c.l.b16 %v81
    %v120 = vpack.c.b16 %v105, %v104
    %v121 = vpack.c.b16 %v107, %v106
    %v122 = vpack.c.b16 %v109, %v108
    %v123 = vpack.c.b16 %v111, %v110
    %v124 = vpack.c.b16 %v113, %v112
    %v125 = vpack.c.b16 %v115, %v114
    %v126 = vpack.c.b16 %v117, %v116
    %v127 = vpack.c.b16 %v119, %v118
    %136 = vmatprep.subr.bf16.mxu0 0
    %137 = vmatpush1.bf16.msra.mxu0 %v120
    %138 = vmatprep.subr.bf16.mxu0 0
    %139 = vmatpush1.bf16.msra.mxu0 %v121
    %140 = vmatprep.subr.bf16.mxu0 0
    %141 = vmatpush1.bf16.msra.mxu0 %v122
    %142 = vmatprep.subr.bf16.mxu0 0
    %143 = vmatpush1.bf16.msra.mxu0 %v123
    %144 = vmatprep.subr.bf16.mxu0 0
    %145 = vmatpush1.bf16.msra.mxu0 %v124
    %146 = vmatprep.subr.bf16.mxu0 0
    %147 = vmatpush1.bf16.msra.mxu0 %v125
    %148 = vmatprep.subr.bf16.mxu0 0
    %149 = vmatpush1.bf16.msra.mxu0 %v126
    %150 = vmatprep.subr.bf16.mxu0 0
    %151 = vmatpush1.bf16.msra.mxu0 %v127
    %152 = vmatprep.subr.bf16.mxu0 0
    %153 = vmatpush1.bf16.msra.mxu0 0
    %154 = vmatprep.subr.bf16.mxu0 0
    %155 = vmatpush1.bf16.msra.mxu0 0
    %156 = vmatprep.subr.bf16.mxu0 0
    %157 = vmatpush1.bf16.msra.mxu0 0
    %158 = vmatprep.subr.bf16.mxu0 0
    %159 = vmatpush1.bf16.msra.mxu0 0
    %160 = vmatprep.subr.bf16.mxu0 0
    %161 = vmatpush1.bf16.msra.mxu0 0
    %162 = vmatprep.subr.bf16.mxu0 0
    %163 = vmatpush1.bf16.msra.mxu0 0
    %164 = vmatprep.subr.bf16.mxu0 0
    %165 = vmatpush1.bf16.msra.mxu0 0
    %166 = vmatprep.subr.bf16.mxu0 0
    %167 = vmatpush1.bf16.msra.mxu0 0
    %168 = vmatprep.mubr.bf16.mxu0 0
    %169 = vmatmul.mubr.bf16.gmra.mrb[0].mxu0 %v86
    %v170 = vpop.f32.mrb[0].mxu0
    %v171 = vadd.f32 0.0, %v170
    %v172 = vpop.f32.mrb[0].mxu0
    %v173 = vpop.f32.mrb[0].mxu0
    %v174 = vadd.f32 0.0, %v173
    %v175 = vpop.f32.mrb[0].mxu0
    %176 = vdwg.mxu0
    %v177 = vadd.f32 %v171, %v174
    %v178 = vrot.slane %v177, 4
    %v179 = vadd.f32 %v177, %v178
    %v180 = vrot.slane %v179, 2
    %v181 = vadd.f32 %v179, %v180
    %v182 = vrot.slane %v181, 1
    %v183 = vadd.f32 %v181, %v182
    %v184 = vmul.f32 %v183, 0.125
    %v185 = vsub.f32 %v171, %v184
    %v186 = vsub.f32 %v174, %v184
    %v187 = vmul.f32 %v185, %v62
    %v188 = vmul.f32 %v186, %v63
    %v189 = vmul.f32 %v187, %v187
    %v190 = vmul.f32 %v188, %v188
    %v191 = vadd.f32 %v189, %v190
    %v192 = vrot.slane %v191, 4
    %v193 = vadd.f32 %v191, %v192
    %v194 = vrot.slane %v193, 2
    %v195 = vadd.f32 %v193, %v194
    %v196 = vrot.slane %v195, 1
    %v197 = vadd.f32 %v195, %v196
    %v198 = vmul.f32 %v197, 0.125
    %v199 = vadd.f32 %v198, 0.0001
    %v200 = vrsqrt.pop %v199
    %v201 = vld [vmem:[%s4] sm:$0x1]
    %v202 = vld [vmem:[%s4 + $0x1] sm:$0x1]
    %v203 = vmul.f32 %v187, %v200
    %v204 = vmul.f32 %v188, %v200
    %v205 = vlaneseq
    %v206 = vshrl.u32 %v205, 7
    %v207 = vsub.s32 0, %v206
    %v208 = vrot.slane %v201, %v207
    %v209 = vmul.f32 %v203, %v208
    %v210 = vmul.f32 %v204, %v208
    %v211 = vlaneseq
    %v212 = vshrl.u32 %v211, 7
    %v213 = vsub.s32 0, %v212
    %v214 = vrot.slane %v202, %v213
    %v215 = vadd.f32 %v209, %v214
    %v216 = vadd.f32 %v210, %v214
    %v217 = vmax.f32 %v215, 0.0
    %v218 = vmax.f32 %v216, 0.0
    %v219 = vmul.f32 %v217, %v62
    %v220 = vmul.f32 %v218, %v63
    %v221 = vpack.c.bf16 %v220, %v219
    %v222 = vld [vmem:[#allocation2] sm:$0xf]
    %v223 = vld [vmem:[#allocation2 + $0x4] sm:$0xf]
    %v224 = vld [vmem:[#allocation2 + $0x8] sm:$0xf]
    %v225 = vld [vmem:[#allocation2 + $0xc] sm:$0xf]
    %v226 = vld [vmem:[#allocation2 + $0x10] sm:$0xf]
    %v227 = vld [vmem:[#allocation2 + $0x14] sm:$0xf]
    %v228 = vld [vmem:[#allocation2 + $0x18] sm:$0xf]
    %v229 = vld [vmem:[#allocation2 + $0x1c] sm:$0xf]
    %v230 = vld [vmem:[#allocation2 + $0x20] sm:$0xf]
    %v231 = vld [vmem:[#allocation2 + $0x24] sm:$0xf]
    %v232 = vld [vmem:[#allocation2 + $0x28] sm:$0xf]
    %v233 = vld [vmem:[#allocation2 + $0x2c] sm:$0xf]
    %v234 = vld [vmem:[#allocation2 + $0x30] sm:$0xf]
    %v235 = vld [vmem:[#allocation2 + $0x34] sm:$0xf]
    %v236 = vld [vmem:[#allocation2 + $0x38] sm:$0xf]
    %v237 = vld [vmem:[#allocation2 + $0x3c] sm:$0xf]
    %v254 = vunpack.c.l.b16 %v222
    %v255 = vunpack.c.l.b16 %v223
    %v256 = vunpack.c.l.b16 %v224
    %v257 = vunpack.c.l.b16 %v225
    %v258 = vunpack.c.l.b16 %v226
    %v259 = vunpack.c.l.b16 %v227
    %v260 = vunpack.c.l.b16 %v228
    %v261 = vunpack.c.l.b16 %v229
    %v262 = vunpack.c.l.b16 %v230
    %v263 = vunpack.c.l.b16 %v231
    %v264 = vunpack.c.l.b16 %v232
    %v265 = vunpack.c.l.b16 %v233
    %v266 = vunpack.c.l.b16 %v234
    %v267 = vunpack.c.l.b16 %v235
    %v268 = vunpack.c.l.b16 %v236
    %v269 = vunpack.c.l.b16 %v237
    %v270 = vpack.c.b16 %v255, %v254
    %v271 = vpack.c.b16 %v257, %v256
    %v272 = vpack.c.b16 %v259, %v258
    %v273 = vpack.c.b16 %v261, %v260
    %v274 = vpack.c.b16 %v263, %v262
    %v275 = vpack.c.b16 %v265, %v264
    %v276 = vpack.c.b16 %v267, %v266
    %v277 = vpack.c.b16 %v269, %v268
    %286 = vmatprep.subr.bf16.mxu0 0
    %287 = vmatpush1.bf16.msra.mxu0 %v270
    %288 = vmatprep.subr.bf16.mxu0 0
    %289 = vmatpush1.bf16.msra.mxu0 %v271
    %290 = vmatprep.subr.bf16.mxu0 0
    %291 = vmatpush1.bf16.msra.mxu0 %v272
    %292 = vmatprep.subr.bf16.mxu0 0
    %293 = vmatpush1.bf16.msra.mxu0 %v273
    %294 = vmatprep.subr.bf16.mxu0 0
    %295 = vmatpush1.bf16.msra.mxu0 %v274
    %296 = vmatprep.subr.bf16.mxu0 0
    %297 = vmatpush1.bf16.msra.mxu0 %v275
    %298 = vmatprep.subr.bf16.mxu0 0
    %299 = vmatpush1.bf16.msra.mxu0 %v276
    %300 = vmatprep.subr.bf16.mxu0 0
    %301 = vmatpush1.bf16.msra.mxu0 %v277
    %302 = vmatprep.subr.bf16.mxu0 0
    %303 = vmatpush1.bf16.msra.mxu0 0
    %304 = vmatprep.subr.bf16.mxu0 0
    %305 = vmatpush1.bf16.msra.mxu0 0
    %306 = vmatprep.subr.bf16.mxu0 0
    %307 = vmatpush1.bf16.msra.mxu0 0
    %308 = vmatprep.subr.bf16.mxu0 0
    %309 = vmatpush1.bf16.msra.mxu0 0
    %310 = vmatprep.subr.bf16.mxu0 0
    %311 = vmatpush1.bf16.msra.mxu0 0
    %312 = vmatprep.subr.bf16.mxu0 0
    %313 = vmatpush1.bf16.msra.mxu0 0
    %314 = vmatprep.subr.bf16.mxu0 0
    %315 = vmatpush1.bf16.msra.mxu0 0
    %316 = vmatprep.subr.bf16.mxu0 0
    %317 = vmatpush1.bf16.msra.mxu0 0
    %318 = vmatprep.mubr.bf16.mxu0 0
    %319 = vmatmul.mubr.bf16.gmra.mrb[0].mxu0 %v221
    %v320 = vpop.f32.mrb[0].mxu0
    %v321 = vadd.f32 0.0, %v320
    %v322 = vpop.f32.mrb[0].mxu0
    %v323 = vpop.f32.mrb[0].mxu0
    %v324 = vadd.f32 0.0, %v323
    %v325 = vpop.f32.mrb[0].mxu0
    %326 = vdwg.mxu0
    %v327 = vadd.f32 %v321, %v324
    %v328 = vrot.slane %v327, 4
    %v329 = vadd.f32 %v327, %v328
    %v330 = vrot.slane %v329, 2
    %v331 = vadd.f32 %v329, %v330
    %v332 = vrot.slane %v331, 1
    %v333 = vadd.f32 %v331, %v332
    %v334 = vmul.f32 %v333, 0.125
    %v335 = vsub.f32 %v321, %v334
    %v336 = vsub.f32 %v324, %v334
    %v337 = vmul.f32 %v335, %v62
    %v338 = vmul.f32 %v336, %v63
    %v339 = vmul.f32 %v337, %v337
    %v340 = vmul.f32 %v338, %v338
    %v341 = vadd.f32 %v339, %v340
    %v342 = vrot.slane %v341, 4
    %v343 = vadd.f32 %v341, %v342
    %v344 = vrot.slane %v343, 2
    %v345 = vadd.f32 %v343, %v344
    %v346 = vrot.slane %v345, 1
    %v347 = vadd.f32 %v345, %v346
    %v348 = vmul.f32 %v347, 0.125
    %v349 = vadd.f32 %v348, 0.0001
    %v350 = vrsqrt.pop %v349
    %v351 = vld [vmem:[%s5] sm:$0x1]
    %v352 = vld [vmem:[%s5 + $0x1] sm:$0x1]
    %v353 = vmul.f32 %v337, %v350
    %v354 = vmul.f32 %v338, %v350
    %v355 = vlaneseq
    %v356 = vshrl.u32 %v355, 7
    %v357 = vsub.s32 0, %v356
    %v358 = vrot.slane %v351, %v357
    %v359 = vmul.f32 %v353, %v358
    %v360 = vmul.f32 %v354, %v358
    %v361 = vlaneseq
    %v362 = vshrl.u32 %v361, 7
    %v363 = vsub.s32 0, %v362
    %v364 = vrot.slane %v352, %v363
    %v365 = vadd.f32 %v359, %v364
    %v366 = vadd.f32 %v360, %v364
    %v367 = vmax.f32 %v365, 0.0
    %v368 = vmax.f32 %v366, 0.0
    %v369 = vmul.f32 %v367, %v62
    %v370 = vmul.f32 %v368, %v63
    %v371 = vpack.c.bf16 %v370, %v369
    %v372 = vld [vmem:[#allocation4] sm:$0xf]
    %v373 = vld [vmem:[#allocation4 + $0x4] sm:$0xf]
    %v374 = vld [vmem:[#allocation4 + $0x8] sm:$0xf]
    %v375 = vld [vmem:[#allocation4 + $0xc] sm:$0xf]
    %v376 = vld [vmem:[#allocation4 + $0x10] sm:$0xf]
    %v377 = vld [vmem:[#allocation4 + $0x14] sm:$0xf]
    %v378 = vld [vmem:[#allocation4 + $0x18] sm:$0xf]
    %v379 = vld [vmem:[#allocation4 + $0x1c] sm:$0xf]
    %v380 = vld [vmem:[#allocation4 + $0x20] sm:$0xf]
    %v381 = vld [vmem:[#allocation4 + $0x24] sm:$0xf]
    %v382 = vld [vmem:[#allocation4 + $0x28] sm:$0xf]
    %v383 = vld [vmem:[#allocation4 + $0x2c] sm:$0xf]
    %v384 = vld [vmem:[#allocation4 + $0x30] sm:$0xf]
    %v385 = vld [vmem:[#allocation4 + $0x34] sm:$0xf]
    %v386 = vld [vmem:[#allocation4 + $0x38] sm:$0xf]
    %v387 = vld [vmem:[#allocation4 + $0x3c] sm:$0xf]
    %v404 = vunpack.c.l.b16 %v372
    %v405 = vunpack.c.l.b16 %v373
    %v406 = vunpack.c.l.b16 %v374
    %v407 = vunpack.c.l.b16 %v375
    %v408 = vunpack.c.l.b16 %v376
    %v409 = vunpack.c.l.b16 %v377
    %v410 = vunpack.c.l.b16 %v378
    %v411 = vunpack.c.l.b16 %v379
    %v412 = vunpack.c.l.b16 %v380
    %v413 = vunpack.c.l.b16 %v381
    %v414 = vunpack.c.l.b16 %v382
    %v415 = vunpack.c.l.b16 %v383
    %v416 = vunpack.c.l.b16 %v384
    %v417 = vunpack.c.l.b16 %v385
    %v418 = vunpack.c.l.b16 %v386
    %v419 = vunpack.c.l.b16 %v387
    %v420 = vpack.c.b16 %v405, %v404
    %v421 = vpack.c.b16 %v407, %v406
    %v422 = vpack.c.b16 %v409, %v408
    %v423 = vpack.c.b16 %v411, %v410
    %v424 = vpack.c.b16 %v413, %v412
    %v425 = vpack.c.b16 %v415, %v414
    %v426 = vpack.c.b16 %v417, %v416
    %v427 = vpack.c.b16 %v419, %v418
    %436 = vmatprep.subr.bf16.mxu0 0
    %437 = vmatpush1.bf16.msra.mxu0 %v420
    %438 = vmatprep.subr.bf16.mxu0 0
    %439 = vmatpush1.bf16.msra.mxu0 %v421
    %440 = vmatprep.subr.bf16.mxu0 0
    %441 = vmatpush1.bf16.msra.mxu0 %v422
    %442 = vmatprep.subr.bf16.mxu0 0
    %443 = vmatpush1.bf16.msra.mxu0 %v423
    %444 = vmatprep.subr.bf16.mxu0 0
    %445 = vmatpush1.bf16.msra.mxu0 %v424
    %446 = vmatprep.subr.bf16.mxu0 0
    %447 = vmatpush1.bf16.msra.mxu0 %v425
    %448 = vmatprep.subr.bf16.mxu0 0
    %449 = vmatpush1.bf16.msra.mxu0 %v426
    %450 = vmatprep.subr.bf16.mxu0 0
    %451 = vmatpush1.bf16.msra.mxu0 %v427
    %452 = vmatprep.subr.bf16.mxu0 0
    %453 = vmatpush1.bf16.msra.mxu0 0
    %454 = vmatprep.subr.bf16.mxu0 0
    %455 = vmatpush1.bf16.msra.mxu0 0
    %456 = vmatprep.subr.bf16.mxu0 0
    %457 = vmatpush1.bf16.msra.mxu0 0
    %458 = vmatprep.subr.bf16.mxu0 0
    %459 = vmatpush1.bf16.msra.mxu0 0
    %460 = vmatprep.subr.bf16.mxu0 0
    %461 = vmatpush1.bf16.msra.mxu0 0
    %462 = vmatprep.subr.bf16.mxu0 0
    %463 = vmatpush1.bf16.msra.mxu0 0
    %464 = vmatprep.subr.bf16.mxu0 0
    %465 = vmatpush1.bf16.msra.mxu0 0
    %466 = vmatprep.subr.bf16.mxu0 0
    %467 = vmatpush1.bf16.msra.mxu0 0
    %468 = vmatprep.mubr.bf16.mxu0 0
    %469 = vmatmul.mubr.bf16.gmra.mrb[0].mxu0 %v371
    %v470 = vpop.f32.mrb[0].mxu0
    %v471 = vadd.f32 0.0, %v470
    %v472 = vpop.f32.mrb[0].mxu0
    %v473 = vpop.f32.mrb[0].mxu0
    %v474 = vadd.f32 0.0, %v473
    %v475 = vpop.f32.mrb[0].mxu0
    %476 = vdwg.mxu0
    %v477 = vadd.f32 %v471, %v474
    %v478 = vrot.slane %v477, 4
    %v479 = vadd.f32 %v477, %v478
    %v480 = vrot.slane %v479, 2
    %v481 = vadd.f32 %v479, %v480
    %v482 = vrot.slane %v481, 1
    %v483 = vadd.f32 %v481, %v482
    %v484 = vmul.f32 %v483, 0.125
    %v485 = vsub.f32 %v471, %v484
    %v486 = vsub.f32 %v474, %v484
    %v487 = vmul.f32 %v485, %v62
    %v488 = vmul.f32 %v486, %v63
    %v489 = vmul.f32 %v487, %v487
    %v490 = vmul.f32 %v488, %v488
    %v491 = vadd.f32 %v489, %v490
    %v492 = vrot.slane %v491, 4
    %v493 = vadd.f32 %v491, %v492
    %v494 = vrot.slane %v493, 2
    %v495 = vadd.f32 %v493, %v494
    %v496 = vrot.slane %v495, 1
    %v497 = vadd.f32 %v495, %v496
    %v498 = vmul.f32 %v497, 0.125
    %v499 = vadd.f32 %v498, 0.0001
    %v500 = vrsqrt.pop %v499
    %v501 = vld [vmem:[%s6] sm:$0x1]
    %v502 = vld [vmem:[%s6 + $0x1] sm:$0x1]
    %v503 = vmul.f32 %v487, %v500
    %v504 = vmul.f32 %v488, %v500
    %v505 = vlaneseq
    %v506 = vshrl.u32 %v505, 7
    %v507 = vsub.s32 0, %v506
    %v508 = vrot.slane %v501, %v507
    %v509 = vmul.f32 %v503, %v508
    %v510 = vmul.f32 %v504, %v508
    %v511 = vlaneseq
    %v512 = vshrl.u32 %v511, 7
    %v513 = vsub.s32 0, %v512
    %v514 = vrot.slane %v502, %v513
    %v515 = vadd.f32 %v509, %v514
    %v516 = vadd.f32 %v510, %v514
    %v517 = vmul.f32 %v515, %v62
    %v518 = vmul.f32 %v516, %v63
    %519 = vst [vmem:[%s7] sm:$0xff] %v517
    %520 = vst [vmem:[%s7 + $0x8] sm:$0xff] %v518
    // Predicated region
    $region38: #{mlp_cl_forward.1} parent=1 // pred_check
      _
    $region39: #{mlp_cl_forward.1} parent=1 // pred_check_branch
      %522 = sbr.rel (0) target = $region41
    $region40: #{mlp_cl_forward.1} parent=1 // pred_region
      _
    $region41: #{mlp_cl_forward.1} parent=1 // pred_fallthru
      _
    // Predicated region
    $region42: #{mlp_cl_forward.1} parent=1 // pred_check
      _
    $region43: #{mlp_cl_forward.1} parent=1 // pred_check_branch
      %524 = sbr.rel (0) target = $region45
    $region44: #{mlp_cl_forward.1} parent=1 // pred_region
      _
    $region45: #{mlp_cl_forward.1} parent=1 // pred_fallthru
      _
    %525 = vsyncpa [#allocation3], 1
    %526 = vsyncpa [#allocation5], 1

</llo_original>
